<compile_context>
chip_gen: v7x
topology: tpu7x:2x2x1
jax: 0.10.0
libtpu: 0.0.40
codegen_flags: <defaults>
</compile_context>

<pallas_src>
import functools

import jax
import jax.numpy as jnp
from jax.experimental import pallas as pl
from jax.experimental.pallas import tpu as pltpu

ALPHA = 10000.0
EPSILON = 0.001


def _vmem_capacity_bytes():
    try:
        info = pltpu.get_tpu_info()
        cap = getattr(info, "vmem_capacity_bytes", None)
        if cap:
            return int(cap)
    except Exception:
        pass
    return 64 << 20  # conservative fallback (v7x per-TC VMEM)


def _ib_loss_kernel(logits_ref, logit_t_ref, feat_ref, out_ref, acc_ref, *,
                    alpha, epsilon, n_total, tile_n, tiles_per_split):
    sp = pl.program_id(0)   # core/split index
    i = pl.program_id(1)    # tile index within split

    @pl.when(i == 0)
    def _():
        acc_ref[...] = jnp.zeros_like(acc_ref)

    logits = logits_ref[...].astype(jnp.float32)      # (tile_n, C)
    logit_t = logit_t_ref[...]                        # (tile_n, 1) f32
    feat = feat_ref[...]                              # (tile_n, 1) f32

    # --- row-wise numerically stable softmax statistics ---
    m = jnp.max(logits, axis=1, keepdims=True)        # (tile_n, 1)
    s = jnp.sum(jnp.exp(logits - m), axis=1, keepdims=True)

    # --- grads = sum_c |softmax_c - onehot_c| = 2 * (1 - p_target) ---
    # Exact divide: p_t error is amplified through alpha / (grads*feat + eps).
    p_t = jnp.exp(logit_t - m) / s
    grads = 2.0 * (1.0 - p_t)

    # --- ib = alpha / (grads * features + epsilon) ---
    ib = alpha / (grads * feat + epsilon)              # (tile_n, 1)

    # --- cross_entropy(reduction='none', weight=None) = logsumexp - logit[target]
    # TODO(synk): per-class `weight` rescaling not implemented (module default weight=None).
    ce = (jnp.log(s) + m) - logit_t                    # (tile_n, 1)

    # --- mask invalid (out-of-batch / clamped-overflow) rows, accumulate ---
    tile_idx = sp * tiles_per_split + i
    row_ids = tile_idx * tile_n + jax.lax.broadcasted_iota(jnp.int32, (tile_n, 1), 0)
    valid = row_ids < n_total
    acc_ref[...] = acc_ref[...] + jnp.sum(jnp.where(valid, ce * ib, 0.0))

    # --- write this split's partial sum exactly once ---
    @pl.when(i == pl.num_programs(1) - 1)
    def _():
        out_ref[...] = jnp.broadcast_to(acc_ref[...].reshape(1, 1, 1), out_ref.shape)


def ib_loss_pallas(logits, target, features, *, alpha=ALPHA, epsilon=EPSILON,
                   tile_n=None):
    """logits: (N, C) f32/bf16, target: (N,) int, features: (N,) or (N, 1) float."""
    n, c = logits.shape
    itemsize = jnp.dtype(logits.dtype).itemsize
    row_align = 16 if logits.dtype == jnp.bfloat16 else 8

    vmem_cap = _vmem_capacity_bytes()

    # --- tile size: biggest batch tile whose double-buffered logits block fits VMEM ---
    if tile_n is None:
        budget = max(vmem_cap - (16 << 20), 8 << 20)   # headroom for scratch/small blocks
        tile_n = min(1024, int(budget // (2 * c * itemsize)))
    if tile_n >= n:
        tile_n = n                                     # single block == full batch dim (exempt)
    else:
        tile_n = max(row_align, (tile_n // row_align) * row_align)

    num_tiles = -(-n // tile_n)
    n_splits = 2 if num_tiles >= 2 else 1              # batch halves -> 2 TCs on v7x
    tiles_per_split = -(-num_tiles // n_splits)

    # --- small per-row inputs (gather target logit in the wrapper: N elements) ---
    target2d = target.reshape(n, 1).astype(jnp.int32)
    logit_t = jnp.take_along_axis(logits, target2d, axis=1).astype(jnp.float32)
    feat2d = features.reshape(n, 1).astype(jnp.float32)

    # index map shared by all row-tiled inputs; clamp overflow tiles of the 2-D grid
    def tile_idx_map(sp, i):
        return (jnp.minimum(sp * tiles_per_split + i, num_tiles - 1), 0)

    # --- VMEM budget: only the logits block is large, double-buffered ---
    block_bytes = tile_n * c * itemsize
    vmem_limit = int(max(min(2 * block_bytes + (6 << 20), vmem_cap - (8 << 20)),
                         16 << 20))

    kernel = functools.partial(
        _ib_loss_kernel, alpha=float(alpha), epsilon=float(epsilon),
        n_total=n, tile_n=tile_n, tiles_per_split=tiles_per_split)

    partials = pl.pallas_call(
        kernel,
        out_shape=jax.ShapeDtypeStruct((n_splits, 8, 128), jnp.float32),
        grid_spec=pltpu.PrefetchScalarGridSpec(
            num_scalar_prefetch=0,
            grid=(n_splits, tiles_per_split),
            in_specs=[
                pl.BlockSpec((tile_n, c), tile_idx_map),   # full-extent class dim, no pad
                pl.BlockSpec((tile_n, 1), tile_idx_map),   # gathered target logit
                pl.BlockSpec((tile_n, 1), tile_idx_map),   # features
            ],
            out_specs=pl.BlockSpec((1, 8, 128), lambda sp, i: (sp, 0, 0)),
            scratch_shapes=[pltpu.VMEM((1, 1), jnp.float32)],
        ),
        compiler_params=pltpu.CompilerParams(
            dimension_semantics=("parallel", "arbitrary"),
            vmem_limit_bytes=vmem_limit,
        ),
    )(logits, logit_t, feat2d)

    return jnp.sum(partials[:, 0, 0]) / jnp.float32(n)


def ib_loss_ref(logits, target, features, *, alpha=ALPHA, epsilon=EPSILON):
    """Pure-JAX reference mirroring the PyTorch module (weight=None)."""
    n, c = logits.shape
    lf = logits.astype(jnp.float32)
    p = jax.nn.softmax(lf, axis=1)
    onehot = jax.nn.one_hot(target, c, dtype=jnp.float32)
    grads = jnp.sum(jnp.abs(p - onehot), axis=1)
    ib = grads * features.reshape(-1)
    ib = alpha / (ib + epsilon)
    lse = jax.scipy.special.logsumexp(lf, axis=1)
    ce = lse - jnp.take_along_axis(lf, target[:, None], axis=1)[:, 0]
    return jnp.mean(ce * ib)


if __name__ == "__main__":
    key = jax.random.PRNGKey(0)
    k1, k2, k3 = jax.random.split(key, 3)

    # small synthetic stand-in for (N, num_classes=8105)
    N, C = 8, 128
    logits = jax.random.normal(k1, (N, C), dtype=jnp.float32)
    target = jax.random.randint(k2, (N,), 0, C, dtype=jnp.int32)
    features = jax.random.uniform(k3, (N, 1), dtype=jnp.float32) + 0.1

    out = jax.block_until_ready(ib_loss_pallas(logits, target, features))
    ref = ib_loss_ref(logits, target, features)
    assert jnp.allclose(out, ref, rtol=1e-3, atol=1e-2), (out, ref)

    # exercise: C not multiple of 128, N not multiple of tile, multi-tile + 2-split grid
    N2, C2 = 70, 200
    l2 = jax.random.normal(k1, (N2, C2), dtype=jnp.float32)
    t2 = jax.random.randint(k2, (N2,), 0, C2, dtype=jnp.int32)
    f2 = jax.random.uniform(k3, (N2,), dtype=jnp.float32) + 0.1
    out2 = jax.block_until_ready(ib_loss_pallas(l2, t2, f2, tile_n=16))
    ref2 = ib_loss_ref(l2, t2, f2)
    assert jnp.allclose(out2, ref2, rtol=1e-3, atol=1e-2), (out2, ref2)

    # exercise: single full-batch block with batch dim not a multiple of 8
    N3, C3 = 13, 200
    l3 = jax.random.normal(k1, (N3, C3), dtype=jnp.float32)
    t3 = jax.random.randint(k2, (N3,), 0, C3, dtype=jnp.int32)
    f3 = jax.random.uniform(k3, (N3,), dtype=jnp.float32) + 0.1
    out3 = jax.block_until_ready(ib_loss_pallas(l3, t3, f3))
    ref3 = ib_loss_ref(l3, t3, f3)
    assert jnp.allclose(out3, ref3, rtol=1e-3, atol=1e-2), (out3, ref3)

    print("KERNEL_OK")
</pallas_src>

<mosaic_0001>
module attributes {stable_mosaic.version = 11 : i64} {
  func.func @_ib_loss_kernel(%arg0: i32, %arg1: i32, %arg2: memref<8x128xf32, #tpu.memory_space<vmem>>, %arg3: memref<8x1xf32, #tpu.memory_space<vmem>>, %arg4: memref<8x1xf32, #tpu.memory_space<vmem>>, %arg5: memref<1x8x128xf32, #tpu.memory_space<vmem>>, %arg6: memref<1x1xf32, #tpu.memory_space<vmem>>) attributes {dimension_semantics = [#tpu.dimension_semantics<parallel>, #tpu.dimension_semantics<arbitrary>], iteration_bounds = array<i64: 1, 1>, scalar_prefetch = 0 : i64, scratch_operands = 1 : i64, tpu.core_type = #tpu.core_type<tc>, window_params = [{transform_indices = @transform_0, window_bounds = array<i64: 8, 128>}, {transform_indices = @transform_1, window_bounds = array<i64: 8, 1>}, {transform_indices = @transform_2, window_bounds = array<i64: 8, 1>}, {transform_indices = @transform_3, window_bounds = array<i64: 1, 8, 128>}]} {
    %c0_i32 = arith.constant 0 : i32
    %0 = arith.cmpi eq, %arg1, %c0_i32 : i32
    %1 = arith.extui %0 : i1 to i32
    %c0_i32_0 = arith.constant 0 : i32
    %2 = arith.cmpi ne, %1, %c0_i32_0 : i32
    scf.if %2 {
      %cst_20 = arith.constant 0.000000e+00 : f32
      %50 = vector.broadcast %cst_20 : f32 to vector<1x1xf32>
      %c0_21 = arith.constant 0 : index
      %c0_22 = arith.constant 0 : index
      %51 = vector.load %arg6[%c0_21, %c0_22] : memref<1x1xf32, #tpu.memory_space<vmem>>, vector<1x1xf32>
      tpu.vector_store %arg6[%c0_21, %c0_22], %50 {strides = array<i32>} : memref<1x1xf32, #tpu.memory_space<vmem>>, vector<1x1xf32>,
    } else {
    }
    %c0 = arith.constant 0 : index
    %c0_1 = arith.constant 0 : index
    %3 = vector.load %arg2[%c0, %c0_1] : memref<8x128xf32, #tpu.memory_space<vmem>>, vector<8x128xf32>
    %c0_2 = arith.constant 0 : index
    %c0_3 = arith.constant 0 : index
    %4 = vector.load %arg3[%c0_2, %c0_3] : memref<8x1xf32, #tpu.memory_space<vmem>>, vector<8x1xf32>
    %c0_4 = arith.constant 0 : index
    %c0_5 = arith.constant 0 : index
    %5 = vector.load %arg4[%c0_4, %c0_5] : memref<8x1xf32, #tpu.memory_space<vmem>>, vector<8x1xf32>
    %cst = arith.constant dense<0xFF800000> : vector<8xf32>
    %6 = vector.multi_reduction <maximumf>, %3, %cst [1] : vector<8x128xf32> to vector<8xf32>
    %7 = vector.shape_cast %6 : vector<8xf32> to vector<8x1xf32>
    %8 = vector.broadcast %7 : vector<8x1xf32> to vector<8x128xf32>
    %9 = arith.subf %3, %8 : vector<8x128xf32>
    %10 = math.exp %9 : vector<8x128xf32>
    %cst_6 = arith.constant dense<0.000000e+00> : vector<8xf32>
    %11 = vector.multi_reduction <add>, %10, %cst_6 [1] : vector<8x128xf32> to vector<8xf32>
    %12 = vector.shape_cast %11 : vector<8xf32> to vector<8x1xf32>
    %13 = arith.subf %4, %7 : vector<8x1xf32>
    %14 = math.exp %13 : vector<8x1xf32>
    %15 = arith.divf %14, %12 : vector<8x1xf32>
    %cst_7 = arith.constant 1.000000e+00 : f32
    %16 = vector.broadcast %cst_7 : f32 to vector<8x1xf32>
    %17 = arith.subf %16, %15 : vector<8x1xf32>
    %cst_8 = arith.constant 2.000000e+00 : f32
    %18 = vector.broadcast %cst_8 : f32 to vector<8x1xf32>
    %19 = arith.mulf %18, %17 : vector<8x1xf32>
    %20 = arith.mulf %19, %5 : vector<8x1xf32>
    %cst_9 = arith.constant 1.000000e-03 : f32
    %21 = vector.broadcast %cst_9 : f32 to vector<8x1xf32>
    %22 = arith.addf %20, %21 : vector<8x1xf32>
    %cst_10 = arith.constant 1.000000e+04 : f32
    %23 = vector.broadcast %cst_10 : f32 to vector<8x1xf32>
    %24 = arith.divf %23, %22 : vector<8x1xf32>
    %25 = math.log %12 : vector<8x1xf32>
    %26 = arith.addf %25, %7 : vector<8x1xf32>
    %27 = arith.subf %26, %4 : vector<8x1xf32>
    %c1_i32 = arith.constant 1 : i32
    %28 = arith.muli %arg0, %c1_i32 : i32
    %29 = arith.addi %28, %arg1 : i32
    %c8_i32 = arith.constant 8 : i32
    %30 = arith.muli %29, %c8_i32 : i32
    %31 = tpu.iota {dimensions = array<i32: 0>} : vector<8x1xi32>
    %32 = vector.broadcast %30 : i32 to vector<8x1xi32>
    %33 = arith.addi %32, %31 : vector<8x1xi32>
    %c8_i32_11 = arith.constant 8 : i32
    %34 = vector.broadcast %c8_i32_11 : i32 to vector<8x1xi32>
    %35 = arith.cmpi slt, %33, %34 : vector<8x1xi32>
    %c0_12 = arith.constant 0 : index
    %c0_13 = arith.constant 0 : index
    %36 = vector.load %arg6[%c0_12, %c0_13] : memref<1x1xf32, #tpu.memory_space<vmem>>, vector<1x1xf32>
    %37 = arith.mulf %27, %24 : vector<8x1xf32>
    %cst_14 = arith.constant 0.000000e+00 : f32
    %38 = vector.broadcast %cst_14 : f32 to vector<8x1xf32>
    %39 = arith.select %35, %37, %38 : vector<8x1xi1>, vector<8x1xf32>
    %40 = vector.shape_cast %39 : vector<8x1xf32> to vector<1x8x1xf32>
    %cst_15 = arith.constant dense<0.000000e+00> : vector<1xf32>
    %41 = vector.multi_reduction <add>, %40, %cst_15 [1, 2] : vector<1x8x1xf32> to vector<1xf32>
    %42 = vector.shape_cast %41 : vector<1xf32> to vector<1x1x1xf32>
    %43 = vector.extract %42[0, 0, 0] : f32 from vector<1x1x1xf32>
    %44 = vector.broadcast %43 : f32 to vector<1x1xf32>
    %45 = arith.addf %36, %44 : vector<1x1xf32>
    %c0_16 = arith.constant 0 : index
    %c0_17 = arith.constant 0 : index
    %46 = vector.load %arg6[%c0_16, %c0_17] : memref<1x1xf32, #tpu.memory_space<vmem>>, vector<1x1xf32>
    tpu.vector_store %arg6[%c0_16, %c0_17], %45 {strides = array<i32>} : memref<1x1xf32, #tpu.memory_space<vmem>>, vector<1x1xf32>,
    %c0_i32_18 = arith.constant 0 : i32
    %47 = arith.cmpi eq, %arg1, %c0_i32_18 : i32
    %48 = arith.extui %47 : i1 to i32
    %c0_i32_19 = arith.constant 0 : i32
    %49 = arith.cmpi ne, %48, %c0_i32_19 : i32
    scf.if %49 {
      %c0_20 = arith.constant 0 : index
      %c0_21 = arith.constant 0 : index
      %50 = vector.load %arg6[%c0_20, %c0_21] : memref<1x1xf32, #tpu.memory_space<vmem>>, vector<1x1xf32>
      %51 = vector.shape_cast %50 : vector<1x1xf32> to vector<1x1x1xf32>
      %52 = vector.shape_cast %51 : vector<1x1x1xf32> to vector<1x1x1xf32>
      %53 = vector.broadcast %52 : vector<1x1x1xf32> to vector<1x8x128xf32>
      %c0_22 = arith.constant 0 : index
      %c0_23 = arith.constant 0 : index
      %c0_24 = arith.constant 0 : index
      %54 = vector.load %arg5[%c0_22, %c0_23, %c0_24] : memref<1x8x128xf32, #tpu.memory_space<vmem>>, vector<1x8x128xf32>
      tpu.vector_store %arg5[%c0_22, %c0_23, %c0_24], %53 {strides = array<i32>} : memref<1x8x128xf32, #tpu.memory_space<vmem>>, vector<1x8x128xf32>,
    } else {
    }
    return
  }
  func.func @transform_0(%arg0: i32, %arg1: i32) -> (i32, i32) {
    %c1_i32 = arith.constant 1 : i32
    %0 = arith.muli %arg0, %c1_i32 : i32
    %1 = arith.addi %0, %arg1 : i32
    %c0_i32 = arith.constant 0 : i32
    %2 = arith.minsi %1, %c0_i32 : i32
    %c0_i32_0 = arith.constant 0 : i32
    %c0_i32_1 = arith.constant 0 : i32
    return %2, %c0_i32_0 : i32, i32
  }
  func.func @transform_1(%arg0: i32, %arg1: i32) -> (i32, i32) {
    %c1_i32 = arith.constant 1 : i32
    %0 = arith.muli %arg0, %c1_i32 : i32
    %1 = arith.addi %0, %arg1 : i32
    %c0_i32 = arith.constant 0 : i32
    %2 = arith.minsi %1, %c0_i32 : i32
    %c0_i32_0 = arith.constant 0 : i32
    %c0_i32_1 = arith.constant 0 : i32
    return %2, %c0_i32_0 : i32, i32
  }
  func.func @transform_2(%arg0: i32, %arg1: i32) -> (i32, i32) {
    %c1_i32 = arith.constant 1 : i32
    %0 = arith.muli %arg0, %c1_i32 : i32
    %1 = arith.addi %0, %arg1 : i32
    %c0_i32 = arith.constant 0 : i32
    %2 = arith.minsi %1, %c0_i32 : i32
    %c0_i32_0 = arith.constant 0 : i32
    %c0_i32_1 = arith.constant 0 : i32
    return %2, %c0_i32_0 : i32, i32
  }
  func.func @transform_3(%arg0: i32, %arg1: i32) -> (i32, i32, i32) {
    %c0_i32 = arith.constant 0 : i32
    %c0_i32_0 = arith.constant 0 : i32
    %c0_i32_1 = arith.constant 0 : i32
    return %arg0, %c0_i32, %c0_i32_0 : i32, i32, i32
  }
}

</mosaic_0001>

<llo_original>
// kernel: tpu_custom_call.1
$region0: #{tpu_custom_call.1}
  #allocation0 [shape = 'u32[]', space=smem, size = 0x4, offset = 0x4, fixed_abs, tag = 'smem constant byte address 0x4 - core index']
  #allocation1 [shape = 'u32[144,128]{1,0:T(1,128)}', space=vmem, size = 0x12000, scoped, tag = 'internal scratch']
  #allocation2 [shape = 'f32[1,1]{1,0:T(1,128)}', space=vmem, size = 0x200, scoped, tag = 'scratch operand']
  %s0 = inlined_call_operand.vmem [shape: f32[8,128], index: 0, kind: input, shape index: {}]
  %s1 = inlined_call_operand.vmem [shape: f32[8,1], index: 1, kind: input, shape index: {}]
  %s2 = inlined_call_operand.vmem [shape: f32[8,1], index: 2, kind: input, shape index: {}]
  %s3 = inlined_call_operand.hbm [shape: f32[1,8,128], index: 3, kind: output, shape index: {}]
  %s4 = sld [smem:[#allocation0]]
  $region30: #{tpu_custom_call.1} parent=0
    _
  %s6 = ssub.s32 1, %s4
  %s7 = scalar_select 0, %s6, %s4
  $region1: #{tpu_custom_call.1} parent=0
    #allocation3 [shape = 'u8[4096]{0}', space=vmem, size = 0x1000, scoped, tag = 'output window, operand 0, single buffered']
    #allocation4 [shape = 's32[1]{0}', space=sflag, size = 0x4, scoped, tag = 'scoped memory for tpu_custom_call.1']
    %8 = vsyncpa [#allocation4], 0
    // Predicated region
    $region2: #{tpu_custom_call.1} parent=1 // pred_check
      _
    $region3: #{tpu_custom_call.1} parent=1 // pred_check_branch
      %10 = sbr.rel (0) target = $region5
    $region4: #{tpu_custom_call.1} parent=1 // pred_region
      %s11 = sadd.s32 0, 0
      %p12 = scmp.lt.s32.totalorder %s11, 0
      %s13 = scalar_select %p12, %s11, 0
      %p14 = scmp.lt.s32.totalorder %s13, 0
      %s15 = scalar_select %p14, %s13, 0
      %s16 = smul.addr %s15, 8
      %s17 = scalar_lea.vmem %s0, %s16
      %s18 = sadd.s32 0, 0
      %p19 = scmp.lt.s32.totalorder %s18, 0
      %s20 = scalar_select %p19, %s18, 0
    $region5: #{tpu_custom_call.1} parent=1 // pred_fallthru
      _
    // Predicated region
    $region6: #{tpu_custom_call.1} parent=1 // pred_check
      _
    $region7: #{tpu_custom_call.1} parent=1 // pred_check_branch
      %22 = sbr.rel (0) target = $region9
    $region8: #{tpu_custom_call.1} parent=1 // pred_region
      %s23 = sadd.s32 0, 0
      %p24 = scmp.lt.s32.totalorder %s23, 0
      %s25 = scalar_select %p24, %s23, 0
      %p26 = scmp.lt.s32.totalorder %s25, 0
      %s27 = scalar_select %p26, %s25, 0
      %s28 = smul.addr %s27, 8
      %s29 = scalar_lea.vmem %s1, %s28
      %s30 = sadd.s32 0, 0
      %p31 = scmp.lt.s32.totalorder %s30, 0
      %s32 = scalar_select %p31, %s30, 0
    $region9: #{tpu_custom_call.1} parent=1 // pred_fallthru
      _
    // Predicated region
    $region10: #{tpu_custom_call.1} parent=1 // pred_check
      _
    $region11: #{tpu_custom_call.1} parent=1 // pred_check_branch
      %34 = sbr.rel (0) target = $region13
    $region12: #{tpu_custom_call.1} parent=1 // pred_region
      %s35 = sadd.s32 0, 0
      %p36 = scmp.lt.s32.totalorder %s35, 0
      %s37 = scalar_select %p36, %s35, 0
      %p38 = scmp.lt.s32.totalorder %s37, 0
      %s39 = scalar_select %p38, %s37, 0
      %s40 = smul.addr %s39, 8
      %s41 = scalar_lea.vmem %s2, %s40
      %s42 = sadd.s32 0, 0
      %p43 = scmp.lt.s32.totalorder %s42, 0
      %s44 = scalar_select %p43, %s42, 0
    $region13: #{tpu_custom_call.1} parent=1 // pred_fallthru
      _
    %s45 = sadd.s32 0, 0
    %p46 = scmp.lt.s32.totalorder %s45, 0
    %s47 = scalar_select %p46, %s45, 0
    %p48 = scmp.lt.s32.totalorder %s47, 0
    %s49 = scalar_select %p48, %s47, 0
    %s50 = smul.addr %s49, 8
    %s51 = scalar_lea.vmem %s0, %s50
    %s52 = sadd.s32 0, 0
    %p53 = scmp.lt.s32.totalorder %s52, 0
    %s54 = scalar_select %p53, %s52, 0
    %p55 = scmp.lt.s32.totalorder %s54, 0
    %s56 = scalar_select %p55, %s54, 0
    %s57 = smul.addr %s56, 8
    %s58 = scalar_lea.vmem %s1, %s57
    %s59 = sadd.s32 0, 0
    %p60 = scmp.lt.s32.totalorder %s59, 0
    %s61 = scalar_select %p60, %s59, 0
    %p62 = scmp.lt.s32.totalorder %s61, 0
    %s63 = scalar_select %p62, %s61, 0
    %s64 = smul.addr %s63, 8
    %s65 = scalar_lea.vmem %s2, %s64
    %s66 = sadd.s32 0, 0
    %p67 = scmp.lt.s32.totalorder %s66, 0
    %s68 = scalar_select %p67, %s66, 0
    %p69 = scmp.lt.s32.totalorder %s68, 0
    %s70 = scalar_select %p69, %s68, 0
    %s71 = smul.addr %s70, 8
    %s72 = scalar_lea.vmem %s0, %s71
    %s73 = sadd.s32 0, 0
    %p74 = scmp.lt.s32.totalorder %s73, 0
    %s75 = scalar_select %p74, %s73, 0
    %s76 = sadd.s32 0, 0
    %p77 = scmp.lt.s32.totalorder %s76, 0
    %s78 = scalar_select %p77, %s76, 0
    %p79 = scmp.lt.s32.totalorder %s78, 0
    %s80 = scalar_select %p79, %s78, 0
    %s81 = smul.addr %s80, 8
    %s82 = scalar_lea.vmem %s1, %s81
    %s83 = sadd.s32 0, 0
    %p84 = scmp.lt.s32.totalorder %s83, 0
    %s85 = scalar_select %p84, %s83, 0
    %s86 = sadd.s32 0, 0
    %p87 = scmp.lt.s32.totalorder %s86, 0
    %s88 = scalar_select %p87, %s86, 0
    %p89 = scmp.lt.s32.totalorder %s88, 0
    %s90 = scalar_select %p89, %s88, 0
    %s91 = smul.addr %s90, 8
    %s92 = scalar_lea.vmem %s2, %s91
    %s93 = sadd.s32 0, 0
    %p94 = scmp.lt.s32.totalorder %s93, 0
    %s95 = scalar_select %p94, %s93, 0
    %p96 = scmp.eq.s32.totalorder 0, 0
    // Predicated region
    $region14: #{tpu_custom_call.1} parent=1 // pred_check
      %p97 = pneg %p96
    $region15: #{tpu_custom_call.1} parent=1 // pred_check_branch
      %99 = sbr.rel (%p97) target = $region17
    $region16: #{tpu_custom_call.1} parent=1 // pred_region
      %vm100 = vcmask 0
      %101 = vst.msk [vmem:[#allocation2] sm:$0x1] %vm100, 0.0
    $region17: #{tpu_custom_call.1} parent=1 // pred_fallthru
      _
    %v102 = vld [vmem:[%s72] sm:$0xff]
    %v103 = vld [vmem:[%s82] sm:$0xff]
    %v104 = vld [vmem:[%s92] sm:$0xff]
    %105 = vmax.xlane.f32.xlu0 %v102
    %v106 = vpop.xlane.xlu0 %105
    %v107 = vsub.f32 %v102, %v106
    %v108 = vmul.f32 %v107, 1.442695
    %v109 = vpow.pop %v108
    %110 = vadd.xlane.f32.xlu0 %v109
    %v111 = vpop.xlane.xlu0 %110
    %v112 = vsub.f32 %v103, %v106
    %v113 = vmul.f32 %v112, 1.442695
    %v114 = vpow.pop %v113
    %v115 = vrcp.pop %v111
    %v116 = vmul.f32 %v114, %v115
    %v117 = vsub.f32 1.0, %v116
    %v118 = vmul.f32 %v117, 2.0
    %v119 = vmul.f32 %v118, %v104
    %v120 = vadd.f32 %v119, 0.001
    %v121 = vrcp.pop %v120
    %v122 = vmul.f32 10000.0, %v121
    %v123 = vlog2.pop %v111
    %v124 = vmul.f32 %v123, 0.6931472
    %v125 = vadd.f32 %v124, %v106
    %v126 = vsub.f32 %v125, %v103
    %s127 = sadd.s32 0, 0
    %s128 = smul.u32 %s127, 8
    %v129 = vlaneseq
    %v130 = vshrl.u32 %v129, 7
    %v131 = vstv %s128
    %v132 = vadd.s32 %v131, %v130
    %vm133 = vcmp.lt.s32.totalorder %v132, 8
    %v134 = vld [vmem:[#allocation2] sm:$0x1]
    %v135 = vmul.f32 %v126, %v122
    %v136 = vsel %vm133, %v135, 0.0
    %vm137 = vcmask 7168
    %v138 = vsel %vm137, %v136, 0.0
    %139 = vadd.xlane.f32.xlu0 %v138
    %v140 = vpop.xlane.xlu0 %139
    %v141 = vrot.slane %v140, 4
    %v142 = vadd.f32 %v140, %v141
    %v143 = vrot.slane %v142, 2
    %v144 = vadd.f32 %v142, %v143
    %v145 = vrot.slane %v144, 1
    %v146 = vadd.f32 %v144, %v145
    %s147 = vtos %v146
    %v148 = vstv %s147
    %v149 = vadd.f32 %v134, %v148
    %vm150 = vcmask 0
    %151 = vst.msk [vmem:[#allocation2] sm:$0x1] %vm150, %v149
    // Predicated region
    $region18: #{tpu_custom_call.1} parent=1 // pred_check
      %p152 = pneg %p96
    $region19: #{tpu_custom_call.1} parent=1 // pred_check_branch
      %154 = sbr.rel (%p152) target = $region21
    $region20: #{tpu_custom_call.1} parent=1 // pred_region
      %v155 = vld [vmem:[#allocation2] sm:$0x1]
      %v157 = vlaneseq
      %v158 = vshrl.u32 %v157, 7
      %v159 = vsub.s32 0, %v158
      %v160 = vrot.slane %v155, %v159
      %161 = vset.pattern.permute.xlu0 0
      %162 = vperm.xlu0 %161, %v160
      %v163 = vpop.permute.xlu0 %162
      %165 = vst [vmem:[#allocation3] sm:$0xff] %v163
    $region21: #{tpu_custom_call.1} parent=1 // pred_fallthru
      _
    // Predicated region
    $region22: #{tpu_custom_call.1} parent=1 // pred_check
      _
    $region23: #{tpu_custom_call.1} parent=1 // pred_check_branch
      %167 = sbr.rel (0) target = $region25
    $region24: #{tpu_custom_call.1} parent=1 // pred_region
      %s169 = ssub.s32 128, 128
      %170 = vsyncadd [#allocation4], %s169
      %s172 = sshll.u32 [#allocation3], 4
      %s173 = int_to_ptr.vmem [resolvable:$true] %s172
      %175 = dma.vmem_to_hbm [thread:$0]  %s173, 128, %s3, [#allocation4]
    $region25: #{tpu_custom_call.1} parent=1 // pred_fallthru
      _
    // Predicated region
    $region26: #{tpu_custom_call.1} parent=1 // pred_check
      _
    $region27: #{tpu_custom_call.1} parent=1 // pred_check_branch
      %177 = sbr.rel (0) target = $region29
    $region28: #{tpu_custom_call.1} parent=1 // pred_region
      %178 = dma.done [#allocation4], 128
    $region29: #{tpu_custom_call.1} parent=1 // pred_fallthru
      _
    %179 = vsyncpa [#allocation4], 1

</llo_original>
